<compile_context>
chip_gen: v7x
topology: tpu7x:2x2x1
jax: 0.10.0
libtpu: 0.0.40
codegen_flags: <defaults>
</compile_context>

<pallas_src>
import functools

import jax
import jax.numpy as jnp
from jax import lax
from jax.experimental import pallas as pl
from jax.experimental.pallas import tpu as pltpu


def _round_up(a, b):
    return ((a + b - 1) // b) * b


def _ensemble_kernel(x_ref, w1_ref, w2_ref, o_ref, *, chunk, nchunks):
    # x_ref:  (Cp, THW)   pixel tile: channels (+ ones channel) on sublanes, pixels on lanes
    # w1_ref: (MKp, Cp)   stacked first-layer weights (+ b1 column, + constant row)
    # w2_ref: (MKp, 1)    stacked second-layer weights with 1/M folded in (+ mean(b2)), f32
    # o_ref:  (1, THW)    ensemble-mean output tile (lane-dense, NCHW order)
    w1 = w1_ref[...]                              # tiny; hoisted out of the chunk loop
    w2 = w2_ref[...].astype(jnp.float32)          # (MKp, 1)

    def body(i, carry):
        off = pl.multiple_of(i * chunk, chunk)
        xc = x_ref[:, pl.ds(off, chunk)]          # (Cp, chunk), native dtype
        # Native-dtype MXU matmul with f32 accumulation (bf16 x bf16 -> f32 on all gens).
        h = jnp.dot(w1, xc, preferred_element_type=jnp.float32)   # (MKp, chunk)
        h = jnp.maximum(h, 0.0)
        # 1-row "matmul" done as VPU multiply + sublane reduction (avoids MXU
        # stationary-operand reloads); stays entirely in vregs.
        out = jnp.sum(h * w2, axis=0, keepdims=True)              # (1, chunk) f32
        o_ref[:, pl.ds(off, chunk)] = out.astype(o_ref.dtype)
        return carry

    lax.fori_loop(0, nchunks, body, 0, unroll=True)


def segmentation_ensemble(x_nchw, w1, b1, w2, b2, *, tile_hw=8192):
    """x_nchw: (N, C, H, W). w1: (M, C, K), b1: (M, K), w2: (M, K), b2: (M, 1).

    Returns the ensemble mean over the M submodel outputs, shape (N, 1, H, W),
    dtype matching the input.
    """
    N, C, H, W = x_nchw.shape
    M, C_, K = w1.shape
    assert C_ == C
    HW = H * W
    MK = M * K
    Cp = C + 1                              # + constant-ones channel (carries b1 and b2)
    MKp = _round_up(MK + 1, 8)              # + constant row for mean(b2); sublane multiple

    compute_dtype = x_nchw.dtype            # do NOT upcast: bf16 inputs stay on bf16 MXU path
    out_dtype = x_nchw.dtype

    # --- Stack per-model weights; fold b1 into the contraction via the ones channel. ---
    w1s = jnp.transpose(w1, (0, 2, 1)).reshape(MK, C)        # row m*K+k = w1[m, :, k]
    b1s = b1.reshape(MK)
    w1_p = jnp.zeros((MKp, Cp), jnp.float32)
    w1_p = w1_p.at[:MK, :C].set(w1s.astype(jnp.float32))
    w1_p = w1_p.at[:MK, C].set(b1s.astype(jnp.float32))      # b1 * ones-channel
    w1_p = w1_p.at[MK, C].set(1.0)                           # const row: ReLU(1*1) == 1
    w1_p = w1_p.astype(compute_dtype)

    # Second layer as a column (VPU path); 1/M ensemble mean folded in (post-ReLU -> exact),
    # mean(b2) carried by the constant row.  Kept f32 for the post-ReLU reduction.
    w2_col = jnp.zeros((MKp, 1), jnp.float32)
    w2_col = w2_col.at[:MK, 0].set(w2.reshape(MK).astype(jnp.float32) * (1.0 / M))
    w2_col = w2_col.at[MK, 0].set(jnp.mean(b2).astype(jnp.float32))

    # --- NCHW-native layout: (N, Cp, HW), pixels on the lane axis, ones channel last. ---
    x3 = x_nchw.reshape(N, C, HW).astype(compute_dtype)
    ones = jnp.ones((N, 1, HW), dtype=compute_dtype)
    x3p = jnp.concatenate([x3, ones], axis=1)                # (N, Cp, HW)

    # --- Spatial tiling: big blocks, in-kernel 256-lane chunks (no (MKp, thw) spill). ---
    CHUNK = 256
    assert tile_hw % CHUNK == 0, "tile_hw must be a multiple of 256"
    if HW <= CHUNK:
        thw = HW                            # single block covers the full spatial extent
        chunk = HW
    else:
        thw = min(tile_hw, _round_up(HW, CHUNK))
        if N == 1 and pl.cdiv(HW, thw) < 2:
            # v7x has 2 TensorCores: make sure a "parallel" axis has >= 2 grid steps.
            thw = max(CHUNK, _round_up(pl.cdiv(HW, 2), CHUNK))
        chunk = CHUNK
    nchunks = thw // chunk
    grid_hw = pl.cdiv(HW, thw)              # partial tail block is masked by Pallas

    itemsize = jnp.dtype(compute_dtype).itemsize
    cost = pl.CostEstimate(
        flops=2 * N * HW * MKp * (Cp + 1),
        transcendentals=0,
        bytes_accessed=(int(x3p.size) * itemsize
                        + N * HW * jnp.dtype(out_dtype).itemsize
                        + int(w1_p.size) * itemsize + int(w2_col.size) * 4),
    )

    kernel = functools.partial(_ensemble_kernel, chunk=chunk, nchunks=nchunks)

    out3 = pl.pallas_call(
        kernel,
        out_shape=jax.ShapeDtypeStruct((N, 1, HW), out_dtype),
        grid_spec=pltpu.PrefetchScalarGridSpec(
            num_scalar_prefetch=0,
            grid=(N, grid_hw),
            in_specs=[
                pl.BlockSpec((pl.Squeezed(), Cp, thw), lambda n, i: (n, 0, i)),  # x tile
                pl.BlockSpec((MKp, Cp), lambda n, i: (0, 0)),                    # stacked w1 (+b1)
                pl.BlockSpec((MKp, 1), lambda n, i: (0, 0)),                     # stacked w2 (+b2)
            ],
            out_specs=pl.BlockSpec((pl.Squeezed(), 1, thw), lambda n, i: (n, 0, i)),
        ),
        compiler_params=pltpu.CompilerParams(
            dimension_semantics=("parallel", "parallel"),
            # Explicit limit (v5e default scoped VMEM is only 16 MiB) with ~25% headroom
            # under v7x's 64 MiB physical VMEM; actual use here is far below this.
            vmem_limit_bytes=48 * 1024 * 1024,
        ),
        cost_estimate=cost,
    )(x3p, w1_p, w2_col)

    # Pure reshape, no transpose: output is already in NCHW order.
    return out3.reshape(N, 1, H, W)


def _reference(x_nchw, w1, b1, w2, b2):
    N, C, H, W = x_nchw.shape
    M = w1.shape[0]
    x_flat = jnp.transpose(x_nchw, (0, 2, 3, 1)).reshape(-1, C).astype(jnp.float32)
    outs = []
    for m in range(M):
        h = jnp.maximum(x_flat @ w1[m].astype(jnp.float32) + b1[m][None, :], 0.0)
        outs.append(jnp.sum(h * w2[m][None, :], axis=-1) + b2[m, 0])
    out = jnp.mean(jnp.stack(outs, axis=-1), axis=-1)
    return out.reshape(N, H, W, 1).transpose(0, 3, 1, 2)


if __name__ == "__main__":
    key = jax.random.PRNGKey(0)

    def make_inputs(key, N, C, H, W, M, K):
        kx, kw1, kb1, kw2, kb2 = jax.random.split(key, 5)
        x = jax.random.normal(kx, (N, C, H, W), dtype=jnp.float32)
        w1 = jax.random.normal(kw1, (M, C, K), dtype=jnp.float32) * 0.1
        b1 = jax.random.normal(kb1, (M, K), dtype=jnp.float32) * 0.1
        w2 = jax.random.normal(kw2, (M, K), dtype=jnp.float32) * 0.1
        b2 = jax.random.normal(kb2, (M, 1), dtype=jnp.float32) * 0.1
        return x, w1, b1, w2, b2

    # Case 1: small shapes (batch=2, channels=4, spatial=16x16, hidden=32, 3 submodels).
    x, w1, b1, w2, b2 = make_inputs(key, 2, 4, 16, 16, 3, 32)
    out = jax.block_until_ready(segmentation_ensemble(x, w1, b1, w2, b2))
    ref = _reference(x, w1, b1, w2, b2)
    assert out.shape == (2, 1, 16, 16), out.shape
    assert jnp.allclose(out, ref, atol=1e-4, rtol=1e-4), float(jnp.max(jnp.abs(out - ref)))

    # Case 2: exercises the multi-chunk inner loop and the N==1 tile split (2 grid steps).
    x, w1, b1, w2, b2 = make_inputs(jax.random.PRNGKey(1), 1, 4, 64, 64, 3, 32)
    out = jax.block_until_ready(segmentation_ensemble(x, w1, b1, w2, b2))
    ref = _reference(x, w1, b1, w2, b2)
    assert out.shape == (1, 1, 64, 64), out.shape
    assert jnp.allclose(out, ref, atol=1e-4, rtol=1e-4), float(jnp.max(jnp.abs(out - ref)))

    print("KERNEL_OK")
</pallas_src>

<mosaic_0001>
module attributes {stable_mosaic.version = 11 : i64} {
  func.func @_ensemble_kernel(%arg0: i32, %arg1: i32, %arg2: memref<1x5x256xf32, #tpu.memory_space<vmem>>, %arg3: memref<104x5xf32, #tpu.memory_space<vmem>>, %arg4: memref<104x1xf32, #tpu.memory_space<vmem>>, %arg5: memref<1x1x256xf32, #tpu.memory_space<vmem>>) attributes {dimension_semantics = [#tpu.dimension_semantics<parallel>, #tpu.dimension_semantics<parallel>], iteration_bounds = array<i64: 2, 1>, scalar_prefetch = 0 : i64, scratch_operands = 0 : i64, tpu.core_type = #tpu.core_type<tc>, window_params = [{transform_indices = @transform_0, window_bounds = array<i64: 1, 5, 256>}, {pipeline_mode = #tpu.pipeline_mode<synchronous>, transform_indices = @transform_1, window_bounds = array<i64: 104, 5>}, {pipeline_mode = #tpu.pipeline_mode<synchronous>, transform_indices = @transform_2, window_bounds = array<i64: 104, 1>}, {transform_indices = @transform_3, window_bounds = array<i64: 1, 1, 256>}]} {
    %c0 = arith.constant 0 : index
    %c0_0 = arith.constant 0 : index
    %0 = vector.load %arg3[%c0, %c0_0] : memref<104x5xf32, #tpu.memory_space<vmem>>, vector<104x5xf32>
    %c0_1 = arith.constant 0 : index
    %c0_2 = arith.constant 0 : index
    %1 = vector.load %arg4[%c0_1, %c0_2] : memref<104x1xf32, #tpu.memory_space<vmem>>, vector<104x1xf32>
    %c0_i32 = arith.constant 0 : i32
    %c256_i32 = arith.constant 256 : i32
    %2 = arith.muli %c0_i32, %c256_i32 : i32
    %3 = tpu.assume_multiple %2, 256 : i32
    %c0_3 = arith.constant 0 : index
    %c0_4 = arith.constant 0 : index
    %4 = arith.index_cast %3 : i32 to index
    %5 = vector.load %arg2[%c0_3, %c0_4, %4] : memref<1x5x256xf32, #tpu.memory_space<vmem>>, vector<1x5x256xf32>
    %6 = vector.shape_cast %5 : vector<1x5x256xf32> to vector<5x256xf32>
    %cst = arith.constant dense<0.000000e+00> : vector<104x256xf32>
    %7 = tpu.matmul %0, %6, %cst {dimension_numbers = #tpu.dot_dimension_numbers<[1], [0], [0], [1], [0, 0, 1, 1], [], []>} : vector<104x5xf32>, vector<5x256xf32>, vector<104x256xf32> -> vector<104x256xf32>
    %cst_5 = arith.constant 0.000000e+00 : f32
    %8 = vector.broadcast %cst_5 : f32 to vector<104x256xf32>
    %9 = arith.maximumf %7, %8 : vector<104x256xf32>
    %10 = vector.broadcast %1 : vector<104x1xf32> to vector<104x256xf32>
    %11 = arith.mulf %9, %10 : vector<104x256xf32>
    %cst_6 = arith.constant dense<0.000000e+00> : vector<256xf32>
    %12 = vector.multi_reduction <add>, %11, %cst_6 [0] : vector<104x256xf32> to vector<256xf32>
    %13 = vector.shape_cast %12 : vector<256xf32> to vector<1x256xf32>
    %c0_7 = arith.constant 0 : index
    %c0_8 = arith.constant 0 : index
    %14 = arith.index_cast %3 : i32 to index
    %15 = vector.load %arg5[%c0_7, %c0_8, %14] : memref<1x1x256xf32, #tpu.memory_space<vmem>>, vector<1x1x256xf32>
    %16 = vector.shape_cast %15 : vector<1x1x256xf32> to vector<1x256xf32>
    %17 = vector.shape_cast %13 : vector<1x256xf32> to vector<1x1x256xf32>
    tpu.vector_store %arg5[%c0_7, %c0_8, %14], %17 {strides = array<i32>} : memref<1x1x256xf32, #tpu.memory_space<vmem>>, vector<1x1x256xf32>,
    %c1_i32 = arith.constant 1 : i32
    return
  }
  func.func @transform_0(%arg0: i32, %arg1: i32) -> (i32, i32, i32) {
    %c0_i32 = arith.constant 0 : i32
    %c0_i32_0 = arith.constant 0 : i32
    return %arg0, %c0_i32, %arg1 : i32, i32, i32
  }
  func.func @transform_1(%arg0: i32, %arg1: i32) -> (i32, i32) {
    %c0_i32 = arith.constant 0 : i32
    %c0_i32_0 = arith.constant 0 : i32
    %c0_i32_1 = arith.constant 0 : i32
    return %c0_i32, %c0_i32_0 : i32, i32
  }
  func.func @transform_2(%arg0: i32, %arg1: i32) -> (i32, i32) {
    %c0_i32 = arith.constant 0 : i32
    %c0_i32_0 = arith.constant 0 : i32
    %c0_i32_1 = arith.constant 0 : i32
    return %c0_i32, %c0_i32_0 : i32, i32
  }
  func.func @transform_3(%arg0: i32, %arg1: i32) -> (i32, i32, i32) {
    %c0_i32 = arith.constant 0 : i32
    %c0_i32_0 = arith.constant 0 : i32
    return %arg0, %c0_i32, %arg1 : i32, i32, i32
  }
}

</mosaic_0001>

<llo_original>
// kernel: tpu_custom_call.1
$region0: #{tpu_custom_call.1}
  #allocation0 [shape = 'u32[]', space=smem, size = 0x4, offset = 0x4, fixed_abs, tag = 'smem constant byte address 0x4 - core index']
  #allocation1 [shape = 'u32[144,128]{1,0:T(1,128)}', space=vmem, size = 0x12000, scoped, tag = 'internal scratch']
  %s0 = inlined_call_operand.vmem [shape: f32[2,5,256], index: 0, kind: input, shape index: {}]
  %s1 = inlined_call_operand.vmem [shape: f32[104,5], index: 1, kind: input, shape index: {}]
  %s2 = inlined_call_operand.vmem [shape: f32[104,1], index: 2, kind: input, shape index: {}]
  %s3 = inlined_call_operand.hbm [shape: f32[2,1,256], index: 3, kind: output, shape index: {}]
  %s4 = sld [smem:[#allocation0]]
  $region45: #{tpu_custom_call.1} parent=0
    _
  %s6 = ssub.s32 1, %s4
  %s7 = scalar_select 0, %s6, %s4
  $region1: #{tpu_custom_call.1} parent=0
    #allocation2 [shape = 'u8[2048]{0}', space=vmem, size = 0x800, scoped, tag = 'output window, operand 0']
    #allocation3 [shape = 's32[2]{0}', space=sflag, size = 0x8, scoped, tag = 'scoped memory for tpu_custom_call.1']
    %8 = vsyncpa [#allocation3], 0
    %s9 = scalar_lea.sflag [#allocation3], 1
    %10 = vsyncpa %s9, 0
    loop: start=0, step=1, limit=4
    $region2: #{tpu_custom_call.1} parent=1 // loop_pre_header
      _
    $region3: #{tpu_custom_call.1} parent=1 // loop_header
      %s12 = sphi 0, %s16
      %p13 = scmp.ge.s32.totalorder %s12, 4
      %s19 = sphi 0, %s31
      %s20 = sphi 0, %s27
      %s21 = sphi 0, %s19
      %s22 = sphi 0, %s20
      %s23 = sphi 0, %s21
      %s24 = sphi 0, %s22
      %s36 = sphi 0, %s38
      %s39 = sphi 0, %s36
      %s40 = sphi 0, %s39
      %s56 = sphi 0, %s40
      %s60 = sphi 0, %s60
      %s62 = sphi 0, %s60
      %s63 = sphi 0, %s62
      %s77 = sphi 0, %s63
      %s81 = sphi 0, %s81
      %s83 = sphi 0, %s81
      %s84 = sphi 0, %s83
      %s98 = sphi 0, %s84
      %s106 = sphi 0, %s108
      %s109 = sphi 0, %s106
      %s110 = sphi 0, %s109
      %s126 = sphi 0, %s110
    $region4: #{tpu_custom_call.1} parent=1 // loop_header_branch
      %15 = sbr.rel (%p13) target = $region8
    $region5: #{tpu_custom_call.1} parent=1 // loop_body
      %s17 = ssub.s32 %s12, 1
      %s18 = ssub.s32 %s12, 2
      %s25 = sadd.s32 1, %s20
      %p26 = scmp.ge.s32.totalorder %s25, 1
      %s27 = scalar_select %p26, 0, %s25
      %s28 = sadd.s32 1, %s19
      %s29 = scalar_select %p26, %s28, %s19
      %p30 = scmp.ge.s32.totalorder %s29, 2
      %s31 = scalar_select %p30, 0, %s29
      %s32 = ssub.s32 %s19, %s31
      %s33 = ssub.s32 %s20, %s27
      %s34 = sor.u32 %s32, %s33
      %p35 = scmp.eq.s32.totalorder %s34, 0
      %s37 = sadd.s32 %s36, 1
      %s38 = scalar_select %p35, %s36, %s37
      %p41 = pneg %p35
      %p42 = scmp.eq.s32.totalorder %s12, 1
      %p43 = por %p41, %p42
      %p44 = scmp.ne.s32.totalorder %s36, %s39
      %p45 = scmp.eq.s32.totalorder %s12, 0
      %p46 = por %p44, %p45
      %p47 = scmp.ne.s32.totalorder %s36, %s39
      %p48 = scmp.eq.s32.totalorder %s17, 1
      %p49 = por %p47, %p48
      %p50 = scmp.ne.s32.totalorder %s39, %s40
      %p51 = scmp.eq.s32.totalorder %s17, 0
      %p52 = por %p50, %p51
      %p53 = scmp.ne.s32.totalorder %s39, %s40
      %p54 = scmp.eq.s32.totalorder %s18, 1
      %p55 = por %p53, %p54
      %p57 = scmp.ne.s32.totalorder %s40, %s56
      %p58 = scmp.eq.s32.totalorder %s18, 0
      %p59 = por %p57, %p58
      %s61 = sadd.s32 %s60, 1
      %p64 = scmp.eq.s32.totalorder %s12, 1
      %p65 = scmp.ne.s32.totalorder %s60, %s62
      %p66 = scmp.eq.s32.totalorder %s12, 0
      %p67 = por %p65, %p66
      %p68 = scmp.ne.s32.totalorder %s60, %s62
      %p69 = scmp.eq.s32.totalorder %s17, 1
      %p70 = por %p68, %p69
      %p71 = scmp.ne.s32.totalorder %s62, %s63
      %p72 = scmp.eq.s32.totalorder %s17, 0
      %p73 = por %p71, %p72
      %p74 = scmp.ne.s32.totalorder %s62, %s63
      %p75 = scmp.eq.s32.totalorder %s18, 1
      %p76 = por %p74, %p75
      %p78 = scmp.ne.s32.totalorder %s63, %s77
      %p79 = scmp.eq.s32.totalorder %s18, 0
      %p80 = por %p78, %p79
      %s82 = sadd.s32 %s81, 1
      %p85 = scmp.eq.s32.totalorder %s12, 1
      %p86 = scmp.ne.s32.totalorder %s81, %s83
      %p87 = scmp.eq.s32.totalorder %s12, 0
      %p88 = por %p86, %p87
      %p89 = scmp.ne.s32.totalorder %s81, %s83
      %p90 = scmp.eq.s32.totalorder %s17, 1
      %p91 = por %p89, %p90
      %p92 = scmp.ne.s32.totalorder %s83, %s84
      %p93 = scmp.eq.s32.totalorder %s17, 0
      %p94 = por %p92, %p93
      %p95 = scmp.ne.s32.totalorder %s83, %s84
      %p96 = scmp.eq.s32.totalorder %s18, 1
      %p97 = por %p95, %p96
      %p99 = scmp.ne.s32.totalorder %s84, %s98
      %p100 = scmp.eq.s32.totalorder %s18, 0
      %p101 = por %p99, %p100
      %s102 = ssub.s32 %s19, %s31
      %s103 = ssub.s32 %s20, %s27
      %s104 = sor.u32 %s102, %s103
      %p105 = scmp.eq.s32.totalorder %s104, 0
      %s107 = sadd.s32 %s106, 1
      %s108 = scalar_select %p105, %s106, %s107
      %p111 = pneg %p105
      %p112 = scmp.eq.s32.totalorder %s12, 1
      %p113 = por %p111, %p112
      %p114 = scmp.ne.s32.totalorder %s106, %s109
      %p115 = scmp.eq.s32.totalorder %s12, 0
      %p116 = por %p114, %p115
      %p117 = scmp.ne.s32.totalorder %s106, %s109
      %p118 = scmp.eq.s32.totalorder %s17, 1
      %p119 = por %p117, %p118
      %p120 = scmp.ne.s32.totalorder %s109, %s110
      %p121 = scmp.eq.s32.totalorder %s17, 0
      %p122 = por %p120, %p121
      %p123 = scmp.ne.s32.totalorder %s109, %s110
      %p124 = scmp.eq.s32.totalorder %s18, 1
      %p125 = por %p123, %p124
      %p127 = scmp.ne.s32.totalorder %s110, %s126
      %p128 = scmp.eq.s32.totalorder %s18, 0
      %p129 = por %p127, %p128
      %p130 = scmp.le.s32.totalorder 1, %s12
      %p131 = scmp.lt.s32.totalorder %s12, 3
      %p132 = pnand %p130, %p131
      %p133 = pneg %p132
      // Predicated region
      $region9: #{tpu_custom_call.1} parent=5 // pred_check
        _
      $region10: #{tpu_custom_call.1} parent=5 // pred_check_branch
        %135 = sbr.rel (%p132) target = $region12
      $region11: #{tpu_custom_call.1} parent=5 // pred_region
        %s136 = ssub.s32 %s12, 1
        // Predicated region
        $region13: #{tpu_custom_call.1} parent=11 // pred_check
          %p137 = pneg %p73
        $region14: #{tpu_custom_call.1} parent=11 // pred_check_branch
          %139 = sbr.rel (%p137) target = $region16
        $region15: #{tpu_custom_call.1} parent=11 // pred_region
          _
        $region16: #{tpu_custom_call.1} parent=11 // pred_fallthru
          _
        // Predicated region
        $region17: #{tpu_custom_call.1} parent=11 // pred_check
          %p140 = pneg %p94
        $region18: #{tpu_custom_call.1} parent=11 // pred_check_branch
          %142 = sbr.rel (%p140) target = $region20
        $region19: #{tpu_custom_call.1} parent=11 // pred_region
          _
        $region20: #{tpu_custom_call.1} parent=11 // pred_fallthru
          _
      $region12: #{tpu_custom_call.1} parent=5 // pred_fallthru
        _
      %p143 = scmp.lt.s32.totalorder %s12, 2
      // Predicated region
      $region21: #{tpu_custom_call.1} parent=5 // pred_check
        %p144 = pneg %p143
      $region22: #{tpu_custom_call.1} parent=5 // pred_check_branch
        %146 = sbr.rel (%p144) target = $region24
      $region23: #{tpu_custom_call.1} parent=5 // pred_region
        // Predicated region
        $region25: #{tpu_custom_call.1} parent=23 // pred_check
          %p147 = pneg %p46
        $region26: #{tpu_custom_call.1} parent=23 // pred_check_branch
          %149 = sbr.rel (%p147) target = $region28
        $region27: #{tpu_custom_call.1} parent=23 // pred_region
          %s150 = smul.u32 2, %s20
          %p151 = scmp.lt.s32.totalorder %s19, 1
          %s152 = scalar_select %p151, %s19, 1
          %p153 = scmp.lt.s32.totalorder %s150, 1
          %s154 = scalar_select %p153, %s150, 1
          %s155 = smul.addr %s152, 2
          %s156 = sadd.s32 %s154, %s155
          %s157 = smul.addr %s156, 8
          %s158 = scalar_lea.vmem %s0, %s157
          %s159 = smul.u32 2, %s20
        $region28: #{tpu_custom_call.1} parent=23 // pred_fallthru
          _
      $region24: #{tpu_custom_call.1} parent=5 // pred_fallthru
        _
      %p160 = scmp.le.s32.totalorder 1, %s12
      %p161 = scmp.lt.s32.totalorder %s12, 3
      %p162 = pnand %p160, %p161
      %p163 = pneg %p162
      // Predicated region
      $region29: #{tpu_custom_call.1} parent=5 // pred_check
        _
      $region30: #{tpu_custom_call.1} parent=5 // pred_check_branch
        %165 = sbr.rel (%p162) target = $region32
      $region31: #{tpu_custom_call.1} parent=5 // pred_region
        %s166 = ssub.s32 %s12, 1
        %s167 = smul.u32 2, %s22
        %p168 = scmp.lt.s32.totalorder %s21, 1
        %s169 = scalar_select %p168, %s21, 1
        %p170 = scmp.lt.s32.totalorder %s167, 1
        %s171 = scalar_select %p170, %s167, 1
        %s172 = smul.addr %s169, 2
        %s173 = sadd.s32 %s171, %s172
        %s174 = smul.addr %s173, 8
        %s175 = scalar_lea.vmem %s0, %s174
        %p176 = pneg %p52
        %p177 = pneg %p49
        %p178 = pneg %p73
        %p179 = pneg %p70
        %p180 = pneg %p94
        %p181 = pneg %p91
        %p182 = pneg %p122
        %p183 = pneg %p119
        %s184 = sand.u32 %s109, 1
        %s185 = scalar_lea.sflag [#allocation3], %s184
        %s186 = sand.u32 %s109, 1
        %s187 = smul.addr %s186, 2
        %s188 = scalar_lea.vmem [#allocation2], %s187
        %s189 = smul.u32 2, %s22
        %p190 = scmp.lt.s32.totalorder %s21, 1
        %s191 = scalar_select %p190, %s21, 1
        %p192 = scmp.lt.s32.totalorder %s189, 1
        %s193 = scalar_select %p192, %s189, 1
        %s194 = smul.addr %s191, 2
        %s195 = sadd.s32 %s193, %s194
        %s196 = smul.addr %s195, 8
        %s197 = scalar_lea.vmem %s0, %s196
        %s198 = smul.u32 2, %s22
        %s199 = smul.u32 2, %s22
        %v200 = vld [vmem:[%s1] sm:$0xff]
        %v201 = vld [vmem:[%s1 + $0x8] sm:$0xff]
        %v202 = vld [vmem:[%s1 + $0x10] sm:$0xff]
        %v203 = vld [vmem:[%s1 + $0x18] sm:$0xff]
        %v204 = vld [vmem:[%s1 + $0x20] sm:$0xff]
        %v205 = vld [vmem:[%s1 + $0x28] sm:$0xff]
        %v206 = vld [vmem:[%s1 + $0x30] sm:$0xff]
        %v207 = vld [vmem:[%s1 + $0x38] sm:$0xff]
        %v208 = vld [vmem:[%s1 + $0x40] sm:$0xff]
        %v209 = vld [vmem:[%s1 + $0x48] sm:$0xff]
        %v210 = vld [vmem:[%s1 + $0x50] sm:$0xff]
        %v211 = vld [vmem:[%s1 + $0x58] sm:$0xff]
        %v212 = vld [vmem:[%s1 + $0x60] sm:$0xff]
        %v213 = vld [vmem:[%s2] sm:$0xff]
        %v214 = vld [vmem:[%s2 + $0x8] sm:$0xff]
        %v215 = vld [vmem:[%s2 + $0x10] sm:$0xff]
        %v216 = vld [vmem:[%s2 + $0x18] sm:$0xff]
        %v217 = vld [vmem:[%s2 + $0x20] sm:$0xff]
        %v218 = vld [vmem:[%s2 + $0x28] sm:$0xff]
        %v219 = vld [vmem:[%s2 + $0x30] sm:$0xff]
        %v220 = vld [vmem:[%s2 + $0x38] sm:$0xff]
        %v221 = vld [vmem:[%s2 + $0x40] sm:$0xff]
        %v222 = vld [vmem:[%s2 + $0x48] sm:$0xff]
        %v223 = vld [vmem:[%s2 + $0x50] sm:$0xff]
        %v224 = vld [vmem:[%s2 + $0x58] sm:$0xff]
        %v225 = vld [vmem:[%s2 + $0x60] sm:$0xff]
        %v226 = vld [vmem:[%s197] sm:$0x1f]
        %v227 = vld [vmem:[%s197 + $0x8] sm:$0x1f]
        %vm228 = vcmask 39936
        %v230 = vsel %vm228, %v200, 0
        %v233 = vsel %vm228, %v201, 0
        %v236 = vsel %vm228, %v202, 0
        %v239 = vsel %vm228, %v203, 0
        %v242 = vsel %vm228, %v204, 0
        %v245 = vsel %vm228, %v205, 0
        %v248 = vsel %vm228, %v206, 0
        %v251 = vsel %vm228, %v207, 0
        %v254 = vsel %vm228, %v208, 0
        %v257 = vsel %vm228, %v209, 0
        %v260 = vsel %vm228, %v210, 0
        %v263 = vsel %vm228, %v211, 0
        %v266 = vsel %vm228, %v212, 0
        %vm268 = vcmask 1044480
        %v270 = vsel %vm268, %v226, 0
        %v273 = vsel %vm268, %v227, 0
        %275 = vmatprep.subr.mxu0 %v273
        %276 = vmatpush1.msra.mxu0 %v270
        %277 = vmatprep.subr.mxu0 0.0
        %278 = vmatpush1.msra.mxu0 0.0
        %279 = vmatprep.subr.mxu0 0.0
        %280 = vmatpush1.msra.mxu0 0.0
        %281 = vmatprep.subr.mxu0 0.0
        %282 = vmatpush1.msra.mxu0 0.0
        %283 = vmatprep.subr.mxu0 0.0
        %284 = vmatpush1.msra.mxu0 0.0
        %285 = vmatprep.subr.mxu0 0.0
        %286 = vmatpush1.msra.mxu0 0.0
        %287 = vmatprep.subr.mxu0 0.0
        %288 = vmatpush1.msra.mxu0 0.0
        %289 = vmatprep.subr.mxu0 0.0
        %290 = vmatpush1.msra.mxu0 0.0
        %291 = vmatprep.subr.mxu0 0.0
        %292 = vmatpush1.msra.mxu0 0.0
        %293 = vmatprep.subr.mxu0 0.0
        %294 = vmatpush1.msra.mxu0 0.0
        %295 = vmatprep.subr.mxu0 0.0
        %296 = vmatpush1.msra.mxu0 0.0
        %297 = vmatprep.subr.mxu0 0.0
        %298 = vmatpush1.msra.mxu0 0.0
        %299 = vmatprep.subr.mxu0 0.0
        %300 = vmatpush1.msra.mxu0 0.0
        %301 = vmatprep.subr.mxu0 0.0
        %302 = vmatpush1.msra.mxu0 0.0
        %303 = vmatprep.subr.mxu0 0.0
        %304 = vmatpush1.msra.mxu0 0.0
        %305 = vmatprep.subr.mxu0 0.0
        %306 = vmatpush1.msra.mxu0 0.0
        %307 = vmatprep.subr.mxu0 0.0
        %308 = vmatpush1.msra.mxu0 0.0
        %309 = vmatprep.subr.mxu0 0.0
        %310 = vmatpush1.msra.mxu0 0.0
        %311 = vmatprep.subr.mxu0 0.0
        %312 = vmatpush1.msra.mxu0 0.0
        %313 = vmatprep.subr.mxu0 0.0
        %314 = vmatpush1.msra.mxu0 0.0
        %315 = vmatprep.subr.mxu0 0.0
        %316 = vmatpush1.msra.mxu0 0.0
        %317 = vmatprep.subr.mxu0 0.0
        %318 = vmatpush1.msra.mxu0 0.0
        %319 = vmatprep.subr.mxu0 0.0
        %320 = vmatpush1.msra.mxu0 0.0
        %321 = vmatprep.subr.mxu0 0.0
        %322 = vmatpush1.msra.mxu0 0.0
        %323 = vmatprep.subr.mxu0 0.0
        %324 = vmatpush1.msra.mxu0 0.0
        %325 = vmatprep.subr.mxu0 0.0
        %326 = vmatpush1.msra.mxu0 0.0
        %327 = vmatprep.subr.mxu0 0.0
        %328 = vmatpush1.msra.mxu0 0.0
        %329 = vmatprep.subr.mxu0 0.0
        %330 = vmatpush1.msra.mxu0 0.0
        %331 = vmatprep.subr.mxu0 0.0
        %332 = vmatpush1.msra.mxu0 0.0
        %333 = vmatprep.subr.mxu0 0.0
        %334 = vmatpush1.msra.mxu0 0.0
        %335 = vmatprep.subr.mxu0 0.0
        %336 = vmatpush1.msra.mxu0 0.0
        %337 = vmatprep.subr.mxu0 0.0
        %338 = vmatpush1.msra.mxu0 0.0
        %339 = vmatprep.mubr.f32.mxu0 0.0
        %340 = vmatmul.mubr.f32.gmra.mrb[0].mxu0 %v230
        %v341 = vpop.f32.mrb[0].mxu0
        %v342 = vadd.f32 0.0, %v341
        %v343 = vpop.f32.mrb[0].mxu0
        %v344 = vadd.f32 0.0, %v343
        %345 = vmatprep.mubr.f32.mxu0 0.0
        %346 = vmatmul.mubr.f32.gmra.mrb[0].mxu0 %v233
        %v347 = vpop.f32.mrb[0].mxu0
        %v348 = vadd.f32 0.0, %v347
        %v349 = vpop.f32.mrb[0].mxu0
        %v350 = vadd.f32 0.0, %v349
        %351 = vmatprep.mubr.f32.mxu0 0.0
        %352 = vmatmul.mubr.f32.gmra.mrb[0].mxu0 %v236
        %v353 = vpop.f32.mrb[0].mxu0
        %v354 = vadd.f32 0.0, %v353
        %v355 = vpop.f32.mrb[0].mxu0
        %v356 = vadd.f32 0.0, %v355
        %357 = vmatprep.mubr.f32.mxu0 0.0
        %358 = vmatmul.mubr.f32.gmra.mrb[0].mxu0 %v239
        %v359 = vpop.f32.mrb[0].mxu0
        %v360 = vadd.f32 0.0, %v359
        %v361 = vpop.f32.mrb[0].mxu0
        %v362 = vadd.f32 0.0, %v361
        %363 = vmatprep.mubr.f32.mxu0 0.0
        %364 = vmatmul.mubr.f32.gmra.mrb[0].mxu0 %v242
        %v365 = vpop.f32.mrb[0].mxu0
        %v366 = vadd.f32 0.0, %v365
        %v367 = vpop.f32.mrb[0].mxu0
        %v368 = vadd.f32 0.0, %v367
        %369 = vmatprep.mubr.f32.mxu0 0.0
        %370 = vmatmul.mubr.f32.gmra.mrb[0].mxu0 %v245
        %v371 = vpop.f32.mrb[0].mxu0
        %v372 = vadd.f32 0.0, %v371
        %v373 = vpop.f32.mrb[0].mxu0
        %v374 = vadd.f32 0.0, %v373
        %375 = vmatprep.mubr.f32.mxu0 0.0
        %376 = vmatmul.mubr.f32.gmra.mrb[0].mxu0 %v248
        %v377 = vpop.f32.mrb[0].mxu0
        %v378 = vadd.f32 0.0, %v377
        %v379 = vpop.f32.mrb[0].mxu0
        %v380 = vadd.f32 0.0, %v379
        %381 = vmatprep.mubr.f32.mxu0 0.0
        %382 = vmatmul.mubr.f32.gmra.mrb[0].mxu0 %v251
        %v383 = vpop.f32.mrb[0].mxu0
        %v384 = vadd.f32 0.0, %v383
        %v385 = vpop.f32.mrb[0].mxu0
        %v386 = vadd.f32 0.0, %v385
        %387 = vmatprep.mubr.f32.mxu0 0.0
        %388 = vmatmul.mubr.f32.gmra.mrb[0].mxu0 %v254
        %v389 = vpop.f32.mrb[0].mxu0
        %v390 = vadd.f32 0.0, %v389
        %v391 = vpop.f32.mrb[0].mxu0
        %v392 = vadd.f32 0.0, %v391
        %393 = vmatprep.mubr.f32.mxu0 0.0
        %394 = vmatmul.mubr.f32.gmra.mrb[0].mxu0 %v257
        %v395 = vpop.f32.mrb[0].mxu0
        %v396 = vadd.f32 0.0, %v395
        %v397 = vpop.f32.mrb[0].mxu0
        %v398 = vadd.f32 0.0, %v397
        %399 = vmatprep.mubr.f32.mxu0 0.0
        %400 = vmatmul.mubr.f32.gmra.mrb[0].mxu0 %v260
        %v401 = vpop.f32.mrb[0].mxu0
        %v402 = vadd.f32 0.0, %v401
        %v403 = vpop.f32.mrb[0].mxu0
        %v404 = vadd.f32 0.0, %v403
        %405 = vmatprep.mubr.f32.mxu0 0.0
        %406 = vmatmul.mubr.f32.gmra.mrb[0].mxu0 %v263
        %v407 = vpop.f32.mrb[0].mxu0
        %v408 = vadd.f32 0.0, %v407
        %v409 = vpop.f32.mrb[0].mxu0
        %v410 = vadd.f32 0.0, %v409
        %411 = vmatprep.mubr.f32.mxu0 0.0
        %412 = vmatmul.mubr.f32.gmra.mrb[0].mxu0 %v266
        %v413 = vpop.f32.mrb[0].mxu0
        %v414 = vadd.f32 0.0, %v413
        %v415 = vpop.f32.mrb[0].mxu0
        %v416 = vadd.f32 0.0, %v415
        %417 = vdwg.mxu0
        %v418 = vmax.f32 %v342, 0.0
        %v419 = vmax.f32 %v344, 0.0
        %v420 = vmax.f32 %v348, 0.0
        %v421 = vmax.f32 %v350, 0.0
        %v422 = vmax.f32 %v354, 0.0
        %v423 = vmax.f32 %v356, 0.0
        %v424 = vmax.f32 %v360, 0.0
        %v425 = vmax.f32 %v362, 0.0
        %v426 = vmax.f32 %v366, 0.0
        %v427 = vmax.f32 %v368, 0.0
        %v428 = vmax.f32 %v372, 0.0
        %v429 = vmax.f32 %v374, 0.0
        %v430 = vmax.f32 %v378, 0.0
        %v431 = vmax.f32 %v380, 0.0
        %v432 = vmax.f32 %v384, 0.0
        %v433 = vmax.f32 %v386, 0.0
        %v434 = vmax.f32 %v390, 0.0
        %v435 = vmax.f32 %v392, 0.0
        %v436 = vmax.f32 %v396, 0.0
        %v437 = vmax.f32 %v398, 0.0
        %v438 = vmax.f32 %v402, 0.0
        %v439 = vmax.f32 %v404, 0.0
        %v440 = vmax.f32 %v408, 0.0
        %v441 = vmax.f32 %v410, 0.0
        %v442 = vmax.f32 %v414, 0.0
        %v443 = vmax.f32 %v416, 0.0
        %445 = vset.pattern.permute.xlu0 0
        %446 = vperm.xlu0 %445, %v213
        %v447 = vpop.permute.xlu0 %446
        %450 = vset.pattern.permute.xlu0 0
        %451 = vperm.xlu0 %450, %v214
        %v452 = vpop.permute.xlu0 %451
        %455 = vset.pattern.permute.xlu0 0
        %456 = vperm.xlu0 %455, %v215
        %v457 = vpop.permute.xlu0 %456
        %460 = vset.pattern.permute.xlu0 0
        %461 = vperm.xlu0 %460, %v216
        %v462 = vpop.permute.xlu0 %461
        %465 = vset.pattern.permute.xlu0 0
        %466 = vperm.xlu0 %465, %v217
        %v467 = vpop.permute.xlu0 %466
        %470 = vset.pattern.permute.xlu0 0
        %471 = vperm.xlu0 %470, %v218
        %v472 = vpop.permute.xlu0 %471
        %475 = vset.pattern.permute.xlu0 0
        %476 = vperm.xlu0 %475, %v219
        %v477 = vpop.permute.xlu0 %476
        %480 = vset.pattern.permute.xlu0 0
        %481 = vperm.xlu0 %480, %v220
        %v482 = vpop.permute.xlu0 %481
        %485 = vset.pattern.permute.xlu0 0
        %486 = vperm.xlu0 %485, %v221
        %v487 = vpop.permute.xlu0 %486
        %490 = vset.pattern.permute.xlu0 0
        %491 = vperm.xlu0 %490, %v222
        %v492 = vpop.permute.xlu0 %491
        %495 = vset.pattern.permute.xlu0 0
        %496 = vperm.xlu0 %495, %v223
        %v497 = vpop.permute.xlu0 %496
        %500 = vset.pattern.permute.xlu0 0
        %501 = vperm.xlu0 %500, %v224
        %v502 = vpop.permute.xlu0 %501
        %505 = vset.pattern.permute.xlu0 0
        %506 = vperm.xlu0 %505, %v225
        %v507 = vpop.permute.xlu0 %506
        %v509 = vmul.f32 %v418, %v447
        %v510 = vmul.f32 %v419, %v447
        %v511 = vmul.f32 %v420, %v452
        %v512 = vmul.f32 %v421, %v452
        %v513 = vmul.f32 %v422, %v457
        %v514 = vmul.f32 %v423, %v457
        %v515 = vmul.f32 %v424, %v462
        %v516 = vmul.f32 %v425, %v462
        %v517 = vmul.f32 %v426, %v467
        %v518 = vmul.f32 %v427, %v467
        %v519 = vmul.f32 %v428, %v472
        %v520 = vmul.f32 %v429, %v472
        %v521 = vmul.f32 %v430, %v477
        %v522 = vmul.f32 %v431, %v477
        %v523 = vmul.f32 %v432, %v482
        %v524 = vmul.f32 %v433, %v482
        %v525 = vmul.f32 %v434, %v487
        %v526 = vmul.f32 %v435, %v487
        %v527 = vmul.f32 %v436, %v492
        %v528 = vmul.f32 %v437, %v492
        %v529 = vmul.f32 %v438, %v497
        %v530 = vmul.f32 %v439, %v497
        %v531 = vmul.f32 %v440, %v502
        %v532 = vmul.f32 %v441, %v502
        %v533 = vmul.f32 %v442, %v507
        %v534 = vmul.f32 %v443, %v507
        %v535 = vadd.f32 %v509, %v511
        %v536 = vadd.f32 %v535, %v513
        %v537 = vadd.f32 %v536, %v515
        %v538 = vadd.f32 %v537, %v517
        %v539 = vadd.f32 %v538, %v519
        %v540 = vadd.f32 %v539, %v521
        %v541 = vadd.f32 %v540, %v523
        %v542 = vadd.f32 %v541, %v525
        %v543 = vadd.f32 %v542, %v527
        %v544 = vadd.f32 %v543, %v529
        %v545 = vadd.f32 %v544, %v531
        %v546 = vadd.f32 %v545, %v533
        %v547 = vrot.slane %v546, 4
        %v548 = vadd.f32 %v546, %v547
        %v549 = vrot.slane %v548, 2
        %v550 = vadd.f32 %v548, %v549
        %v551 = vrot.slane %v550, 1
        %v552 = vadd.f32 %v550, %v551
        %v553 = vadd.f32 %v510, %v512
        %v554 = vadd.f32 %v553, %v514
        %v555 = vadd.f32 %v554, %v516
        %v556 = vadd.f32 %v555, %v518
        %v557 = vadd.f32 %v556, %v520
        %v558 = vadd.f32 %v557, %v522
        %v559 = vadd.f32 %v558, %v524
        %v560 = vadd.f32 %v559, %v526
        %v561 = vadd.f32 %v560, %v528
        %v562 = vadd.f32 %v561, %v530
        %v563 = vadd.f32 %v562, %v532
        %v564 = vadd.f32 %v563, %v534
        %v565 = vrot.slane %v564, 4
        %v566 = vadd.f32 %v564, %v565
        %v567 = vrot.slane %v566, 2
        %v568 = vadd.f32 %v566, %v567
        %v569 = vrot.slane %v568, 1
        %v570 = vadd.f32 %v568, %v569
        %v573 = vcombine.low %v552, %v570
        %v575 = vunpack.c.l.s4 1966171168
        %v576 = vunpack.c.0.s8 %v575
        %v577 = vlaneseq
        %v578 = vshrl.u32 %v577, 7
        %v579 = vsub.s32 %v576, %v578
        %v580 = vrot.slane %v573, %v579
        %v582 = vunpack.c.l.s4 1966171168
        %v583 = vunpack.c.0.s8 %v582
        %v584 = vlaneseq
        %v585 = vshrl.u32 %v584, 7
        %v586 = vsub.s32 %v583, %v585
        %v587 = vrot.slane %v580, %v586
        %v589 = vlaneseq
        %vm590 = vcmp.ge.s32.totalorder %v589, 0
        %vm591 = vcmp.lt.s32.totalorder %v589, 256
        %vm592 = vmand %vm590, %vm591
        %593 = vst.msk [vmem:[%s188] sm:$0x3] %vm592, %v587
        %s594 = sand.u32 %s109, 1
        %s595 = scalar_lea.sflag [#allocation3], %s594
        %s596 = sand.u32 %s109, 1
        %s597 = smul.addr %s596, 2
        %s598 = scalar_lea.vmem [#allocation2], %s597
        // Predicated region
        $region33: #{tpu_custom_call.1} parent=31 // pred_check
          %p599 = pneg %p119
        $region34: #{tpu_custom_call.1} parent=31 // pred_check_branch
          %601 = sbr.rel (%p599) target = $region36
        $region35: #{tpu_custom_call.1} parent=31 // pred_region
          %s602 = smul.u32 2, %s22
          %s604 = ssub.s32 32, 32
          %605 = vsyncadd %s595, %s604
          %s606 = smul.addr %s21, 2
          %s607 = sadd.s32 %s602, %s606
          %s608 = smul.addr %s607, 16
          %s609 = scalar_lea.hbm %s3, %s608
          %s611 = sshll.u32 %s598, 4
          %s612 = int_to_ptr.vmem [resolvable:$true] %s611
          %614 = dma.vmem_to_hbm [thread:$0]  %s612, 32, %s609, %s595
        $region36: #{tpu_custom_call.1} parent=31 // pred_fallthru
          _
      $region32: #{tpu_custom_call.1} parent=5 // pred_fallthru
        _
      %p615 = scmp.le.s32.totalorder 2, %s12
      // Predicated region
      $region37: #{tpu_custom_call.1} parent=5 // pred_check
        %p616 = pneg %p615
      $region38: #{tpu_custom_call.1} parent=5 // pred_check_branch
        %618 = sbr.rel (%p616) target = $region40
      $region39: #{tpu_custom_call.1} parent=5 // pred_region
        %s619 = ssub.s32 %s12, 2
        // Predicated region
        $region41: #{tpu_custom_call.1} parent=39 // pred_check
          %p620 = pneg %p125
        $region42: #{tpu_custom_call.1} parent=39 // pred_check_branch
          %622 = sbr.rel (%p620) target = $region44
        $region43: #{tpu_custom_call.1} parent=39 // pred_region
          %s623 = sand.u32 %s110, 1
          %s624 = scalar_lea.sflag [#allocation3], %s623
          %s625 = sand.u32 %s110, 1
          %s626 = smul.addr %s625, 2
          %s627 = scalar_lea.vmem [#allocation2], %s626
          %628 = dma.done %s624, 32
        $region44: #{tpu_custom_call.1} parent=39 // pred_fallthru
          _
      $region40: #{tpu_custom_call.1} parent=5 // pred_fallthru
        _
    $region6: #{tpu_custom_call.1} parent=1 // loop_footer
      %s16 = sadd.s32 1, %s12
    $region7: #{tpu_custom_call.1} parent=1 // loop_footer_branch
      %11 = sbr.rel target = $region3
    $region8: #{tpu_custom_call.1} parent=1 // loop_exit
      _
    %629 = vsyncpa [#allocation3], 1
    %s630 = scalar_lea.sflag [#allocation3], 1
    %631 = vsyncpa %s630, 1

</llo_original>
